<compile_context>
chip_gen: v6e
topology: v6e:2x2x1
jax: 0.10.0
libtpu: 0.0.40
codegen_flags: <defaults>
</compile_context>

<pallas_src>
import math

import jax
import jax.numpy as jnp
from jax import lax
from jax.experimental import pallas as pl
from jax.experimental.pallas import tpu as pltpu


def _make_dense_block_kernel(W, C, L):
    # Tap shifts in flattened row-major image coordinates:
    # [-W-1, -W, -W+1, -1, 0, 1, W-1, W, W+1]
    shifts = [(dy - 1) * W + (dx - 1) for dy in range(3) for dx in range(3)]

    def kernel(x_ref, wbase_ref, wchain_ref, mask_ref, out_ref):
        # x_ref: (1, C, L)   wbase_ref: (5C, 9C)   wchain_ref: (5, C, 9C)
        # mask_ref: (9C, L)  f32 {0,1} multiplicative edge masks
        x0 = x_ref[0]                      # (C, L) f32
        mask = mask_ref[...]               # (9C, L)
        wbase = wbase_ref[...]             # (5C, 9C)

        def conv3x3(xin, w2d):
            # Zero-padded 3x3 conv as a single MXU contraction:
            #   (cout, 9C) x (9C, L).
            # pltpu.roll gives shifted[p] = xin[p + s]; lane wraparound (and
            # cross-image leakage for the folded batch) is cancelled by the
            # precomputed edge mask.
            taps = [xin if s == 0 else pltpu.roll(xin, (-s) % L, axis=1)
                    for s in shifts]
            stack = jnp.concatenate(taps, axis=0) * mask          # (9C, L)
            return jnp.dot(w2d, stack, preferred_element_type=jnp.float32)

        # One fused conv of x0: rows = [conv1 | conv2a | conv3a | conv4a | conv5a]
        base = conv3x3(x0, wbase)                                 # (5C, L)

        y = base[0:C]                                             # x1
        y = base[C:2 * C] + conv3x3(y, wchain_ref[0])             # x2
        y = base[2 * C:3 * C] + conv3x3(y, wchain_ref[1])         # x3
        y = base[3 * C:4 * C] + conv3x3(y, wchain_ref[2])         # x4
        y = base[4 * C:5 * C] + conv3x3(y, wchain_ref[3]) + x0    # x5
        out_ref[0] = conv3x3(y, wchain_ref[4]).astype(out_ref.dtype)  # x6

    return kernel


def _pick_lane_batch(N, HW):
    """How many images to fold onto the lane axis per grid step.

    Prefer a grid length >= 2 (keeps both v7x TensorCores busy under
    dimension_semantics=("parallel",)); within that, make each step as wide as
    a modest lane budget allows (wider MXU RHS, fewer grid steps / DMAs).
    """
    lane_budget = 16 * 1024           # lanes per step (64 KiB per f32 row)
    best = 1
    for nb in range(1, N + 1):
        if N % nb or nb * HW > lane_budget:
            continue
        if N >= 2 and N // nb < 2:
            continue
        best = nb
    return best


def dense_block(x_nchw, w1, w2, w3, w4, w5, w6):
    """PyTorch-style interface: x NCHW, weights OIHW."""
    N, C, H, W = x_nchw.shape
    HW = H * W
    Nb = _pick_lane_batch(N, HW)
    G = N // Nb
    L = Nb * HW

    def flat_w(w_oihw):
        o, i = w_oihw.shape[0], w_oihw.shape[1]
        # (o, i, kh, kw) -> (o, (kh*3 + kw)*i + ci)  -- matches the tap stack.
        return jnp.transpose(w_oihw, (0, 2, 3, 1)).reshape(o, 9 * i)

    # (N,C,H,W) -> (G, C, Nb*HW): Nb images contiguous along the lane axis.
    x = (x_nchw.astype(jnp.float32).reshape(G, Nb, C, HW)
         .transpose(0, 2, 1, 3).reshape(G, C, L))

    # torch.cat((x0, x_prev), dim=1): first C input channels act on x0,
    # last C act on the chain value.
    wbase = flat_w(jnp.concatenate(
        [w1, w2[:, :C], w3[:, :C], w4[:, :C], w5[:, :C]],
        axis=0)).astype(jnp.float32)                                   # (5C, 9C)
    wchain = jnp.stack(
        [flat_w(w2[:, C:]), flat_w(w3[:, C:]), flat_w(w4[:, C:]),
         flat_w(w5[:, C:]), flat_w(w6)], axis=0).astype(jnp.float32)   # (5,C,9C)

    # Precomputed f32 multiplicative edge masks, one row per (tap, in-channel).
    idx = jnp.arange(L, dtype=jnp.int32)
    col = idx % W
    row = (idx // W) % H   # % H so dy-taps never leak across folded images.
    rows = []
    for dy in range(3):
        for dx in range(3):
            valid = jnp.ones((L,), jnp.bool_)
            if dy == 0:
                valid = jnp.logical_and(valid, row >= 1)
            elif dy == 2:
                valid = jnp.logical_and(valid, row <= H - 2)
            if dx == 0:
                valid = jnp.logical_and(valid, col >= 1)
            elif dx == 2:
                valid = jnp.logical_and(valid, col <= W - 2)
            rows.append(valid.astype(jnp.float32))
    mask = jnp.repeat(jnp.stack(rows, axis=0), C, axis=0)              # (9C, L)

    kernel = _make_dense_block_kernel(W, C, L)

    out = pl.pallas_call(
        kernel,
        out_shape=jax.ShapeDtypeStruct((G, C, L), jnp.float32),
        grid_spec=pltpu.PrefetchScalarGridSpec(
            num_scalar_prefetch=0,
            grid=(G,),
            in_specs=[
                pl.BlockSpec((1, C, L), lambda b: (b, 0, 0)),
                pl.BlockSpec((5 * C, 9 * C), lambda b: (0, 0)),
                pl.BlockSpec((5, C, 9 * C), lambda b: (0, 0, 0)),
                pl.BlockSpec((9 * C, L), lambda b: (0, 0)),
            ],
            out_specs=pl.BlockSpec((1, C, L), lambda b: (b, 0, 0)),
        ),
        compiler_params=pltpu.CompilerParams(
            dimension_semantics=("parallel",),
        ),
    )(x, wbase, wchain, mask)

    return (out.reshape(G, C, Nb, HW).transpose(0, 2, 1, 3)
            .reshape(N, C, H, W))


# ---------------- deterministic parameter init ----------------
def conv_weight(key, cout, cin):
    bound = 1.0 / math.sqrt(cin * 9)
    return jax.random.uniform(key, (cout, cin, 3, 3), jnp.float32, -bound, bound)


# ---------------- pure-JAX reference ----------------
def _reference(x0, w1, w2, w3, w4, w5, w6):
    def conv(x, w):
        return lax.conv_general_dilated(
            x, w, (1, 1), ((1, 1), (1, 1)),
            dimension_numbers=("NCHW", "OIHW", "NCHW"),
            precision=lax.Precision.HIGHEST)

    x1 = conv(x0, w1)
    x2 = conv(jnp.concatenate([x0, x1], axis=1), w2)
    x3 = conv(jnp.concatenate([x0, x2], axis=1), w3)
    x4 = conv(jnp.concatenate([x0, x3], axis=1), w4)
    x5 = conv(jnp.concatenate([x0, x4], axis=1), w5) + x0
    return conv(x5, w6)


if __name__ == "__main__":
    N, C, H, W = 2, 4, 16, 16
    key = jax.random.PRNGKey(0)
    ks = jax.random.split(key, 7)

    x = jax.random.normal(ks[0], (N, C, H, W), jnp.float32)
    w1 = conv_weight(ks[1], C, C)
    w2 = conv_weight(ks[2], C, 2 * C)
    w3 = conv_weight(ks[3], C, 2 * C)
    w4 = conv_weight(ks[4], C, 2 * C)
    w5 = conv_weight(ks[5], C, 2 * C)
    w6 = conv_weight(ks[6], C, C)

    out = jax.jit(dense_block)(x, w1, w2, w3, w4, w5, w6)
    out = jax.block_until_ready(out)

    ref = _reference(x, w1, w2, w3, w4, w5, w6)
    assert out.shape == (N, C, H, W)
    max_err = float(jnp.max(jnp.abs(out - ref)))
    assert max_err < 1e-3, f"mismatch vs reference: max abs err {max_err}"

    print("KERNEL_OK")
</pallas_src>

<mosaic_0001>
module attributes {stable_mosaic.version = 11 : i64} {
  func.func @kernel(%arg0: i32, %arg1: memref<1x4x256xf32, #tpu.memory_space<vmem>>, %arg2: memref<20x36xf32, #tpu.memory_space<vmem>>, %arg3: memref<5x4x36xf32, #tpu.memory_space<vmem>>, %arg4: memref<36x256xf32, #tpu.memory_space<vmem>>, %arg5: memref<1x4x256xf32, #tpu.memory_space<vmem>>) attributes {dimension_semantics = [#tpu.dimension_semantics<parallel>], iteration_bounds = array<i64: 2>, scalar_prefetch = 0 : i64, scratch_operands = 0 : i64, tpu.core_type = #tpu.core_type<tc>, window_params = [{transform_indices = @transform_0, window_bounds = array<i64: 1, 4, 256>}, {pipeline_mode = #tpu.pipeline_mode<synchronous>, transform_indices = @transform_1, window_bounds = array<i64: 20, 36>}, {pipeline_mode = #tpu.pipeline_mode<synchronous>, transform_indices = @transform_2, window_bounds = array<i64: 5, 4, 36>}, {pipeline_mode = #tpu.pipeline_mode<synchronous>, transform_indices = @transform_3, window_bounds = array<i64: 36, 256>}, {transform_indices = @transform_4, window_bounds = array<i64: 1, 4, 256>}]} {
    %c0 = arith.constant 0 : index
    %c0_0 = arith.constant 0 : index
    %c0_1 = arith.constant 0 : index
    %0 = vector.load %arg1[%c0, %c0_0, %c0_1] : memref<1x4x256xf32, #tpu.memory_space<vmem>>, vector<1x4x256xf32>
    %1 = vector.shape_cast %0 : vector<1x4x256xf32> to vector<4x256xf32>
    %c0_2 = arith.constant 0 : index
    %c0_3 = arith.constant 0 : index
    %2 = vector.load %arg4[%c0_2, %c0_3] : memref<36x256xf32, #tpu.memory_space<vmem>>, vector<36x256xf32>
    %c0_4 = arith.constant 0 : index
    %c0_5 = arith.constant 0 : index
    %3 = vector.load %arg2[%c0_4, %c0_5] : memref<20x36xf32, #tpu.memory_space<vmem>>, vector<20x36xf32>
    %c17_i32 = arith.constant 17 : i32
    %4 = tpu.dynamic_rotate %1 by %c17_i32 dim 1 : vector<4x256xf32>, i32 -> vector<4x256xf32>
    %c16_i32 = arith.constant 16 : i32
    %5 = tpu.dynamic_rotate %1 by %c16_i32 dim 1 : vector<4x256xf32>, i32 -> vector<4x256xf32>
    %c15_i32 = arith.constant 15 : i32
    %6 = tpu.dynamic_rotate %1 by %c15_i32 dim 1 : vector<4x256xf32>, i32 -> vector<4x256xf32>
    %c1_i32 = arith.constant 1 : i32
    %7 = tpu.dynamic_rotate %1 by %c1_i32 dim 1 : vector<4x256xf32>, i32 -> vector<4x256xf32>
    %c255_i32 = arith.constant 255 : i32
    %8 = tpu.dynamic_rotate %1 by %c255_i32 dim 1 : vector<4x256xf32>, i32 -> vector<4x256xf32>
    %c241_i32 = arith.constant 241 : i32
    %9 = tpu.dynamic_rotate %1 by %c241_i32 dim 1 : vector<4x256xf32>, i32 -> vector<4x256xf32>
    %c240_i32 = arith.constant 240 : i32
    %10 = tpu.dynamic_rotate %1 by %c240_i32 dim 1 : vector<4x256xf32>, i32 -> vector<4x256xf32>
    %c239_i32 = arith.constant 239 : i32
    %11 = tpu.dynamic_rotate %1 by %c239_i32 dim 1 : vector<4x256xf32>, i32 -> vector<4x256xf32>
    %12 = tpu.concatenate %4, %5, %6, %7, %1, %8, %9, %10, %11 in 0 : vector<4x256xf32>, vector<4x256xf32>, vector<4x256xf32>, vector<4x256xf32>, vector<4x256xf32>, vector<4x256xf32>, vector<4x256xf32>, vector<4x256xf32>, vector<4x256xf32> -> vector<36x256xf32>
    %13 = arith.mulf %12, %2 : vector<36x256xf32>
    %cst = arith.constant dense<0.000000e+00> : vector<20x256xf32>
    %14 = tpu.matmul %3, %13, %cst {dimension_numbers = #tpu.dot_dimension_numbers<[1], [0], [0], [1], [0, 0, 1, 1], [], []>} : vector<20x36xf32>, vector<36x256xf32>, vector<20x256xf32> -> vector<20x256xf32>
    %15 = vector.extract_strided_slice %14 {offsets = [0, 0], sizes = [4, 256], strides = [1, 1]} : vector<20x256xf32> to vector<4x256xf32>
    %16 = vector.extract_strided_slice %14 {offsets = [4, 0], sizes = [4, 256], strides = [1, 1]} : vector<20x256xf32> to vector<4x256xf32>
    %c0_6 = arith.constant 0 : index
    %c0_7 = arith.constant 0 : index
    %c0_8 = arith.constant 0 : index
    %17 = vector.load %arg3[%c0_6, %c0_7, %c0_8] : memref<5x4x36xf32, #tpu.memory_space<vmem>>, vector<1x4x36xf32>
    %18 = vector.shape_cast %17 : vector<1x4x36xf32> to vector<4x36xf32>
    %c17_i32_9 = arith.constant 17 : i32
    %19 = tpu.dynamic_rotate %15 by %c17_i32_9 dim 1 : vector<4x256xf32>, i32 -> vector<4x256xf32>
    %c16_i32_10 = arith.constant 16 : i32
    %20 = tpu.dynamic_rotate %15 by %c16_i32_10 dim 1 : vector<4x256xf32>, i32 -> vector<4x256xf32>
    %c15_i32_11 = arith.constant 15 : i32
    %21 = tpu.dynamic_rotate %15 by %c15_i32_11 dim 1 : vector<4x256xf32>, i32 -> vector<4x256xf32>
    %c1_i32_12 = arith.constant 1 : i32
    %22 = tpu.dynamic_rotate %15 by %c1_i32_12 dim 1 : vector<4x256xf32>, i32 -> vector<4x256xf32>
    %c255_i32_13 = arith.constant 255 : i32
    %23 = tpu.dynamic_rotate %15 by %c255_i32_13 dim 1 : vector<4x256xf32>, i32 -> vector<4x256xf32>
    %c241_i32_14 = arith.constant 241 : i32
    %24 = tpu.dynamic_rotate %15 by %c241_i32_14 dim 1 : vector<4x256xf32>, i32 -> vector<4x256xf32>
    %c240_i32_15 = arith.constant 240 : i32
    %25 = tpu.dynamic_rotate %15 by %c240_i32_15 dim 1 : vector<4x256xf32>, i32 -> vector<4x256xf32>
    %c239_i32_16 = arith.constant 239 : i32
    %26 = tpu.dynamic_rotate %15 by %c239_i32_16 dim 1 : vector<4x256xf32>, i32 -> vector<4x256xf32>
    %27 = tpu.concatenate %19, %20, %21, %22, %15, %23, %24, %25, %26 in 0 : vector<4x256xf32>, vector<4x256xf32>, vector<4x256xf32>, vector<4x256xf32>, vector<4x256xf32>, vector<4x256xf32>, vector<4x256xf32>, vector<4x256xf32>, vector<4x256xf32> -> vector<36x256xf32>
    %28 = arith.mulf %27, %2 : vector<36x256xf32>
    %cst_17 = arith.constant dense<0.000000e+00> : vector<4x256xf32>
    %29 = tpu.matmul %18, %28, %cst_17 {dimension_numbers = #tpu.dot_dimension_numbers<[1], [0], [0], [1], [0, 0, 1, 1], [], []>} : vector<4x36xf32>, vector<36x256xf32>, vector<4x256xf32> -> vector<4x256xf32>
    %30 = arith.addf %16, %29 : vector<4x256xf32>
    %31 = vector.extract_strided_slice %14 {offsets = [8, 0], sizes = [4, 256], strides = [1, 1]} : vector<20x256xf32> to vector<4x256xf32>
    %c1 = arith.constant 1 : index
    %c0_18 = arith.constant 0 : index
    %c0_19 = arith.constant 0 : index
    %32 = vector.load %arg3[%c1, %c0_18, %c0_19] : memref<5x4x36xf32, #tpu.memory_space<vmem>>, vector<1x4x36xf32>
    %33 = vector.shape_cast %32 : vector<1x4x36xf32> to vector<4x36xf32>
    %c17_i32_20 = arith.constant 17 : i32
    %34 = tpu.dynamic_rotate %30 by %c17_i32_20 dim 1 : vector<4x256xf32>, i32 -> vector<4x256xf32>
    %c16_i32_21 = arith.constant 16 : i32
    %35 = tpu.dynamic_rotate %30 by %c16_i32_21 dim 1 : vector<4x256xf32>, i32 -> vector<4x256xf32>
    %c15_i32_22 = arith.constant 15 : i32
    %36 = tpu.dynamic_rotate %30 by %c15_i32_22 dim 1 : vector<4x256xf32>, i32 -> vector<4x256xf32>
    %c1_i32_23 = arith.constant 1 : i32
    %37 = tpu.dynamic_rotate %30 by %c1_i32_23 dim 1 : vector<4x256xf32>, i32 -> vector<4x256xf32>
    %c255_i32_24 = arith.constant 255 : i32
    %38 = tpu.dynamic_rotate %30 by %c255_i32_24 dim 1 : vector<4x256xf32>, i32 -> vector<4x256xf32>
    %c241_i32_25 = arith.constant 241 : i32
    %39 = tpu.dynamic_rotate %30 by %c241_i32_25 dim 1 : vector<4x256xf32>, i32 -> vector<4x256xf32>
    %c240_i32_26 = arith.constant 240 : i32
    %40 = tpu.dynamic_rotate %30 by %c240_i32_26 dim 1 : vector<4x256xf32>, i32 -> vector<4x256xf32>
    %c239_i32_27 = arith.constant 239 : i32
    %41 = tpu.dynamic_rotate %30 by %c239_i32_27 dim 1 : vector<4x256xf32>, i32 -> vector<4x256xf32>
    %42 = tpu.concatenate %34, %35, %36, %37, %30, %38, %39, %40, %41 in 0 : vector<4x256xf32>, vector<4x256xf32>, vector<4x256xf32>, vector<4x256xf32>, vector<4x256xf32>, vector<4x256xf32>, vector<4x256xf32>, vector<4x256xf32>, vector<4x256xf32> -> vector<36x256xf32>
    %43 = arith.mulf %42, %2 : vector<36x256xf32>
    %cst_28 = arith.constant dense<0.000000e+00> : vector<4x256xf32>
    %44 = tpu.matmul %33, %43, %cst_28 {dimension_numbers = #tpu.dot_dimension_numbers<[1], [0], [0], [1], [0, 0, 1, 1], [], []>} : vector<4x36xf32>, vector<36x256xf32>, vector<4x256xf32> -> vector<4x256xf32>
    %45 = arith.addf %31, %44 : vector<4x256xf32>
    %46 = vector.extract_strided_slice %14 {offsets = [12, 0], sizes = [4, 256], strides = [1, 1]} : vector<20x256xf32> to vector<4x256xf32>
    %c2 = arith.constant 2 : index
    %c0_29 = arith.constant 0 : index
    %c0_30 = arith.constant 0 : index
    %47 = vector.load %arg3[%c2, %c0_29, %c0_30] : memref<5x4x36xf32, #tpu.memory_space<vmem>>, vector<1x4x36xf32>
    %48 = vector.shape_cast %47 : vector<1x4x36xf32> to vector<4x36xf32>
    %c17_i32_31 = arith.constant 17 : i32
    %49 = tpu.dynamic_rotate %45 by %c17_i32_31 dim 1 : vector<4x256xf32>, i32 -> vector<4x256xf32>
    %c16_i32_32 = arith.constant 16 : i32
    %50 = tpu.dynamic_rotate %45 by %c16_i32_32 dim 1 : vector<4x256xf32>, i32 -> vector<4x256xf32>
    %c15_i32_33 = arith.constant 15 : i32
    %51 = tpu.dynamic_rotate %45 by %c15_i32_33 dim 1 : vector<4x256xf32>, i32 -> vector<4x256xf32>
    %c1_i32_34 = arith.constant 1 : i32
    %52 = tpu.dynamic_rotate %45 by %c1_i32_34 dim 1 : vector<4x256xf32>, i32 -> vector<4x256xf32>
    %c255_i32_35 = arith.constant 255 : i32
    %53 = tpu.dynamic_rotate %45 by %c255_i32_35 dim 1 : vector<4x256xf32>, i32 -> vector<4x256xf32>
    %c241_i32_36 = arith.constant 241 : i32
    %54 = tpu.dynamic_rotate %45 by %c241_i32_36 dim 1 : vector<4x256xf32>, i32 -> vector<4x256xf32>
    %c240_i32_37 = arith.constant 240 : i32
    %55 = tpu.dynamic_rotate %45 by %c240_i32_37 dim 1 : vector<4x256xf32>, i32 -> vector<4x256xf32>
    %c239_i32_38 = arith.constant 239 : i32
    %56 = tpu.dynamic_rotate %45 by %c239_i32_38 dim 1 : vector<4x256xf32>, i32 -> vector<4x256xf32>
    %57 = tpu.concatenate %49, %50, %51, %52, %45, %53, %54, %55, %56 in 0 : vector<4x256xf32>, vector<4x256xf32>, vector<4x256xf32>, vector<4x256xf32>, vector<4x256xf32>, vector<4x256xf32>, vector<4x256xf32>, vector<4x256xf32>, vector<4x256xf32> -> vector<36x256xf32>
    %58 = arith.mulf %57, %2 : vector<36x256xf32>
    %cst_39 = arith.constant dense<0.000000e+00> : vector<4x256xf32>
    %59 = tpu.matmul %48, %58, %cst_39 {dimension_numbers = #tpu.dot_dimension_numbers<[1], [0], [0], [1], [0, 0, 1, 1], [], []>} : vector<4x36xf32>, vector<36x256xf32>, vector<4x256xf32> -> vector<4x256xf32>
    %60 = arith.addf %46, %59 : vector<4x256xf32>
    %61 = vector.extract_strided_slice %14 {offsets = [16, 0], sizes = [4, 256], strides = [1, 1]} : vector<20x256xf32> to vector<4x256xf32>
    %c3 = arith.constant 3 : index
    %c0_40 = arith.constant 0 : index
    %c0_41 = arith.constant 0 : index
    %62 = vector.load %arg3[%c3, %c0_40, %c0_41] : memref<5x4x36xf32, #tpu.memory_space<vmem>>, vector<1x4x36xf32>
    %63 = vector.shape_cast %62 : vector<1x4x36xf32> to vector<4x36xf32>
    %c17_i32_42 = arith.constant 17 : i32
    %64 = tpu.dynamic_rotate %60 by %c17_i32_42 dim 1 : vector<4x256xf32>, i32 -> vector<4x256xf32>
    %c16_i32_43 = arith.constant 16 : i32
    %65 = tpu.dynamic_rotate %60 by %c16_i32_43 dim 1 : vector<4x256xf32>, i32 -> vector<4x256xf32>
    %c15_i32_44 = arith.constant 15 : i32
    %66 = tpu.dynamic_rotate %60 by %c15_i32_44 dim 1 : vector<4x256xf32>, i32 -> vector<4x256xf32>
    %c1_i32_45 = arith.constant 1 : i32
    %67 = tpu.dynamic_rotate %60 by %c1_i32_45 dim 1 : vector<4x256xf32>, i32 -> vector<4x256xf32>
    %c255_i32_46 = arith.constant 255 : i32
    %68 = tpu.dynamic_rotate %60 by %c255_i32_46 dim 1 : vector<4x256xf32>, i32 -> vector<4x256xf32>
    %c241_i32_47 = arith.constant 241 : i32
    %69 = tpu.dynamic_rotate %60 by %c241_i32_47 dim 1 : vector<4x256xf32>, i32 -> vector<4x256xf32>
    %c240_i32_48 = arith.constant 240 : i32
    %70 = tpu.dynamic_rotate %60 by %c240_i32_48 dim 1 : vector<4x256xf32>, i32 -> vector<4x256xf32>
    %c239_i32_49 = arith.constant 239 : i32
    %71 = tpu.dynamic_rotate %60 by %c239_i32_49 dim 1 : vector<4x256xf32>, i32 -> vector<4x256xf32>
    %72 = tpu.concatenate %64, %65, %66, %67, %60, %68, %69, %70, %71 in 0 : vector<4x256xf32>, vector<4x256xf32>, vector<4x256xf32>, vector<4x256xf32>, vector<4x256xf32>, vector<4x256xf32>, vector<4x256xf32>, vector<4x256xf32>, vector<4x256xf32> -> vector<36x256xf32>
    %73 = arith.mulf %72, %2 : vector<36x256xf32>
    %cst_50 = arith.constant dense<0.000000e+00> : vector<4x256xf32>
    %74 = tpu.matmul %63, %73, %cst_50 {dimension_numbers = #tpu.dot_dimension_numbers<[1], [0], [0], [1], [0, 0, 1, 1], [], []>} : vector<4x36xf32>, vector<36x256xf32>, vector<4x256xf32> -> vector<4x256xf32>
    %75 = arith.addf %61, %74 : vector<4x256xf32>
    %76 = arith.addf %75, %1 : vector<4x256xf32>
    %c4 = arith.constant 4 : index
    %c0_51 = arith.constant 0 : index
    %c0_52 = arith.constant 0 : index
    %77 = vector.load %arg3[%c4, %c0_51, %c0_52] : memref<5x4x36xf32, #tpu.memory_space<vmem>>, vector<1x4x36xf32>
    %78 = vector.shape_cast %77 : vector<1x4x36xf32> to vector<4x36xf32>
    %c17_i32_53 = arith.constant 17 : i32
    %79 = tpu.dynamic_rotate %76 by %c17_i32_53 dim 1 : vector<4x256xf32>, i32 -> vector<4x256xf32>
    %c16_i32_54 = arith.constant 16 : i32
    %80 = tpu.dynamic_rotate %76 by %c16_i32_54 dim 1 : vector<4x256xf32>, i32 -> vector<4x256xf32>
    %c15_i32_55 = arith.constant 15 : i32
    %81 = tpu.dynamic_rotate %76 by %c15_i32_55 dim 1 : vector<4x256xf32>, i32 -> vector<4x256xf32>
    %c1_i32_56 = arith.constant 1 : i32
    %82 = tpu.dynamic_rotate %76 by %c1_i32_56 dim 1 : vector<4x256xf32>, i32 -> vector<4x256xf32>
    %c255_i32_57 = arith.constant 255 : i32
    %83 = tpu.dynamic_rotate %76 by %c255_i32_57 dim 1 : vector<4x256xf32>, i32 -> vector<4x256xf32>
    %c241_i32_58 = arith.constant 241 : i32
    %84 = tpu.dynamic_rotate %76 by %c241_i32_58 dim 1 : vector<4x256xf32>, i32 -> vector<4x256xf32>
    %c240_i32_59 = arith.constant 240 : i32
    %85 = tpu.dynamic_rotate %76 by %c240_i32_59 dim 1 : vector<4x256xf32>, i32 -> vector<4x256xf32>
    %c239_i32_60 = arith.constant 239 : i32
    %86 = tpu.dynamic_rotate %76 by %c239_i32_60 dim 1 : vector<4x256xf32>, i32 -> vector<4x256xf32>
    %87 = tpu.concatenate %79, %80, %81, %82, %76, %83, %84, %85, %86 in 0 : vector<4x256xf32>, vector<4x256xf32>, vector<4x256xf32>, vector<4x256xf32>, vector<4x256xf32>, vector<4x256xf32>, vector<4x256xf32>, vector<4x256xf32>, vector<4x256xf32> -> vector<36x256xf32>
    %88 = arith.mulf %87, %2 : vector<36x256xf32>
    %cst_61 = arith.constant dense<0.000000e+00> : vector<4x256xf32>
    %89 = tpu.matmul %78, %88, %cst_61 {dimension_numbers = #tpu.dot_dimension_numbers<[1], [0], [0], [1], [0, 0, 1, 1], [], []>} : vector<4x36xf32>, vector<36x256xf32>, vector<4x256xf32> -> vector<4x256xf32>
    %c0_62 = arith.constant 0 : index
    %c0_63 = arith.constant 0 : index
    %c0_64 = arith.constant 0 : index
    %90 = vector.load %arg5[%c0_62, %c0_63, %c0_64] : memref<1x4x256xf32, #tpu.memory_space<vmem>>, vector<1x4x256xf32>
    %91 = vector.shape_cast %90 : vector<1x4x256xf32> to vector<4x256xf32>
    %92 = vector.shape_cast %89 : vector<4x256xf32> to vector<1x4x256xf32>
    tpu.vector_store %arg5[%c0_62, %c0_63, %c0_64], %92 {strides = array<i32>} : memref<1x4x256xf32, #tpu.memory_space<vmem>>, vector<1x4x256xf32>,
    return
  }
  func.func @transform_0(%arg0: i32) -> (i32, i32, i32) {
    %c0_i32 = arith.constant 0 : i32
    %c0_i32_0 = arith.constant 0 : i32
    %c0_i32_1 = arith.constant 0 : i32
    return %arg0, %c0_i32, %c0_i32_0 : i32, i32, i32
  }
  func.func @transform_1(%arg0: i32) -> (i32, i32) {
    %c0_i32 = arith.constant 0 : i32
    %c0_i32_0 = arith.constant 0 : i32
    %c0_i32_1 = arith.constant 0 : i32
    return %c0_i32, %c0_i32_0 : i32, i32
  }
  func.func @transform_2(%arg0: i32) -> (i32, i32, i32) {
    %c0_i32 = arith.constant 0 : i32
    %c0_i32_0 = arith.constant 0 : i32
    %c0_i32_1 = arith.constant 0 : i32
    %c0_i32_2 = arith.constant 0 : i32
    return %c0_i32, %c0_i32_0, %c0_i32_1 : i32, i32, i32
  }
  func.func @transform_3(%arg0: i32) -> (i32, i32) {
    %c0_i32 = arith.constant 0 : i32
    %c0_i32_0 = arith.constant 0 : i32
    %c0_i32_1 = arith.constant 0 : i32
    return %c0_i32, %c0_i32_0 : i32, i32
  }
  func.func @transform_4(%arg0: i32) -> (i32, i32, i32) {
    %c0_i32 = arith.constant 0 : i32
    %c0_i32_0 = arith.constant 0 : i32
    %c0_i32_1 = arith.constant 0 : i32
    return %arg0, %c0_i32, %c0_i32_0 : i32, i32, i32
  }
}

</mosaic_0001>

<llo_original>
// kernel: dense_block.1
$region0: #{dense_block.1}
  #allocation0 [shape = 'u32[]', space=smem, size = 0x4, offset = 0x4, fixed_abs, tag = 'smem constant byte address 0x4 - core index']
  #allocation1 [shape = 'u32[144,128]{1,0:T(1,128)}', space=vmem, size = 0x12000, scoped, tag = 'internal scratch']
  %s0 = inlined_call_operand.vmem [shape: f32[2,4,256], index: 0, kind: input, shape index: {}]
  %s1 = inlined_call_operand.vmem [shape: f32[20,36], index: 1, kind: input, shape index: {}]
  %s2 = inlined_call_operand.vmem [shape: f32[5,4,36], index: 2, kind: input, shape index: {}]
  %s3 = inlined_call_operand.vmem [shape: f32[36,256], index: 3, kind: input, shape index: {}]
  %s4 = inlined_call_operand.vmem [shape: f32[2,4,256], index: 4, kind: output, shape index: {}]
  %s5 = sld [smem:[#allocation0]]
  $region49: #{dense_block.1} parent=0
    _
  %s7 = ssub.s32 1, %s5
  %s8 = scalar_select 0, %s7, %s5
  loop: start=0, step=1, limit=4
  $region2: #{dense_block.1} parent=0 // loop_pre_header
    _
  $region3: #{dense_block.1} parent=0 // loop_header
    %s10 = sphi 0, %s14
    %p11 = scmp.ge.s32.totalorder %s10, 4
    %s20 = sphi 0, %s22
    %s23 = sphi 0, %s20
    %s24 = sphi 0, %s23
    %s40 = sphi 0, %s24
    %s44 = sphi 0, %s44
    %s46 = sphi 0, %s44
    %s47 = sphi 0, %s46
    %s61 = sphi 0, %s47
    %s65 = sphi 0, %s65
    %s67 = sphi 0, %s65
    %s68 = sphi 0, %s67
    %s82 = sphi 0, %s68
    %s86 = sphi 0, %s86
    %s88 = sphi 0, %s86
    %s89 = sphi 0, %s88
    %s103 = sphi 0, %s89
    %s109 = sphi 0, %s111
    %s112 = sphi 0, %s109
    %s113 = sphi 0, %s112
    %s129 = sphi 0, %s113
  $region4: #{dense_block.1} parent=0 // loop_header_branch
    %13 = sbr.rel (%p11) target = $region8
  $region5: #{dense_block.1} parent=0 // loop_body
    %s15 = ssub.s32 %s10, 1
    %s16 = ssub.s32 %s10, 2
    %s17 = sadd.s32 %s10, 1
    %s18 = ssub.s32 %s10, %s17
    %p19 = scmp.eq.s32.totalorder %s18, 0
    %s21 = sadd.s32 %s20, 1
    %s22 = scalar_select %p19, %s20, %s21
    %p25 = pneg %p19
    %p26 = scmp.eq.s32.totalorder %s10, 1
    %p27 = por %p25, %p26
    %p28 = scmp.ne.s32.totalorder %s20, %s23
    %p29 = scmp.eq.s32.totalorder %s10, 0
    %p30 = por %p28, %p29
    %p31 = scmp.ne.s32.totalorder %s20, %s23
    %p32 = scmp.eq.s32.totalorder %s15, 1
    %p33 = por %p31, %p32
    %p34 = scmp.ne.s32.totalorder %s23, %s24
    %p35 = scmp.eq.s32.totalorder %s15, 0
    %p36 = por %p34, %p35
    %p37 = scmp.ne.s32.totalorder %s23, %s24
    %p38 = scmp.eq.s32.totalorder %s16, 1
    %p39 = por %p37, %p38
    %p41 = scmp.ne.s32.totalorder %s24, %s40
    %p42 = scmp.eq.s32.totalorder %s16, 0
    %p43 = por %p41, %p42
    %s45 = sadd.s32 %s44, 1
    %p48 = scmp.eq.s32.totalorder %s10, 1
    %p49 = scmp.ne.s32.totalorder %s44, %s46
    %p50 = scmp.eq.s32.totalorder %s10, 0
    %p51 = por %p49, %p50
    %p52 = scmp.ne.s32.totalorder %s44, %s46
    %p53 = scmp.eq.s32.totalorder %s15, 1
    %p54 = por %p52, %p53
    %p55 = scmp.ne.s32.totalorder %s46, %s47
    %p56 = scmp.eq.s32.totalorder %s15, 0
    %p57 = por %p55, %p56
    %p58 = scmp.ne.s32.totalorder %s46, %s47
    %p59 = scmp.eq.s32.totalorder %s16, 1
    %p60 = por %p58, %p59
    %p62 = scmp.ne.s32.totalorder %s47, %s61
    %p63 = scmp.eq.s32.totalorder %s16, 0
    %p64 = por %p62, %p63
    %s66 = sadd.s32 %s65, 1
    %p69 = scmp.eq.s32.totalorder %s10, 1
    %p70 = scmp.ne.s32.totalorder %s65, %s67
    %p71 = scmp.eq.s32.totalorder %s10, 0
    %p72 = por %p70, %p71
    %p73 = scmp.ne.s32.totalorder %s65, %s67
    %p74 = scmp.eq.s32.totalorder %s15, 1
    %p75 = por %p73, %p74
    %p76 = scmp.ne.s32.totalorder %s67, %s68
    %p77 = scmp.eq.s32.totalorder %s15, 0
    %p78 = por %p76, %p77
    %p79 = scmp.ne.s32.totalorder %s67, %s68
    %p80 = scmp.eq.s32.totalorder %s16, 1
    %p81 = por %p79, %p80
    %p83 = scmp.ne.s32.totalorder %s68, %s82
    %p84 = scmp.eq.s32.totalorder %s16, 0
    %p85 = por %p83, %p84
    %s87 = sadd.s32 %s86, 1
    %p90 = scmp.eq.s32.totalorder %s10, 1
    %p91 = scmp.ne.s32.totalorder %s86, %s88
    %p92 = scmp.eq.s32.totalorder %s10, 0
    %p93 = por %p91, %p92
    %p94 = scmp.ne.s32.totalorder %s86, %s88
    %p95 = scmp.eq.s32.totalorder %s15, 1
    %p96 = por %p94, %p95
    %p97 = scmp.ne.s32.totalorder %s88, %s89
    %p98 = scmp.eq.s32.totalorder %s15, 0
    %p99 = por %p97, %p98
    %p100 = scmp.ne.s32.totalorder %s88, %s89
    %p101 = scmp.eq.s32.totalorder %s16, 1
    %p102 = por %p100, %p101
    %p104 = scmp.ne.s32.totalorder %s89, %s103
    %p105 = scmp.eq.s32.totalorder %s16, 0
    %p106 = por %p104, %p105
    %s107 = ssub.s32 %s10, %s17
    %p108 = scmp.eq.s32.totalorder %s107, 0
    %s110 = sadd.s32 %s109, 1
    %s111 = scalar_select %p108, %s109, %s110
    %p114 = pneg %p108
    %p115 = scmp.eq.s32.totalorder %s10, 1
    %p116 = por %p114, %p115
    %p117 = scmp.ne.s32.totalorder %s109, %s112
    %p118 = scmp.eq.s32.totalorder %s10, 0
    %p119 = por %p117, %p118
    %p120 = scmp.ne.s32.totalorder %s109, %s112
    %p121 = scmp.eq.s32.totalorder %s15, 1
    %p122 = por %p120, %p121
    %p123 = scmp.ne.s32.totalorder %s112, %s113
    %p124 = scmp.eq.s32.totalorder %s15, 0
    %p125 = por %p123, %p124
    %p126 = scmp.ne.s32.totalorder %s112, %s113
    %p127 = scmp.eq.s32.totalorder %s16, 1
    %p128 = por %p126, %p127
    %p130 = scmp.ne.s32.totalorder %s113, %s129
    %p131 = scmp.eq.s32.totalorder %s16, 0
    %p132 = por %p130, %p131
    %p133 = scmp.le.s32.totalorder 1, %s10
    %p134 = scmp.lt.s32.totalorder %s10, 3
    %p135 = pnand %p133, %p134
    %p136 = pneg %p135
    // Predicated region
    $region9: #{dense_block.1} parent=5 // pred_check
      _
    $region10: #{dense_block.1} parent=5 // pred_check_branch
      %138 = sbr.rel (%p135) target = $region12
    $region11: #{dense_block.1} parent=5 // pred_region
      %s139 = ssub.s32 %s10, 1
      // Predicated region
      $region13: #{dense_block.1} parent=11 // pred_check
        %p140 = pneg %p57
      $region14: #{dense_block.1} parent=11 // pred_check_branch
        %142 = sbr.rel (%p140) target = $region16
      $region15: #{dense_block.1} parent=11 // pred_region
        _
      $region16: #{dense_block.1} parent=11 // pred_fallthru
        _
      // Predicated region
      $region17: #{dense_block.1} parent=11 // pred_check
        %p143 = pneg %p78
      $region18: #{dense_block.1} parent=11 // pred_check_branch
        %145 = sbr.rel (%p143) target = $region20
      $region19: #{dense_block.1} parent=11 // pred_region
        _
      $region20: #{dense_block.1} parent=11 // pred_fallthru
        _
      // Predicated region
      $region21: #{dense_block.1} parent=11 // pred_check
        %p146 = pneg %p99
      $region22: #{dense_block.1} parent=11 // pred_check_branch
        %148 = sbr.rel (%p146) target = $region24
      $region23: #{dense_block.1} parent=11 // pred_region
        _
      $region24: #{dense_block.1} parent=11 // pred_fallthru
        _
    $region12: #{dense_block.1} parent=5 // pred_fallthru
      _
    %p149 = scmp.lt.s32.totalorder %s10, 2
    // Predicated region
    $region25: #{dense_block.1} parent=5 // pred_check
      %p150 = pneg %p149
    $region26: #{dense_block.1} parent=5 // pred_check_branch
      %152 = sbr.rel (%p150) target = $region28
    $region27: #{dense_block.1} parent=5 // pred_region
      // Predicated region
      $region29: #{dense_block.1} parent=27 // pred_check
        %p153 = pneg %p30
      $region30: #{dense_block.1} parent=27 // pred_check_branch
        %155 = sbr.rel (%p153) target = $region32
      $region31: #{dense_block.1} parent=27 // pred_region
        %p156 = scmp.lt.s32.totalorder %s10, 1
        %s157 = scalar_select %p156, %s10, 1
        %s158 = smul.addr %s157, 2
        %s159 = smul.addr %s158, 4
        %s160 = scalar_lea.vmem %s0, %s159
      $region32: #{dense_block.1} parent=27 // pred_fallthru
        _
    $region28: #{dense_block.1} parent=5 // pred_fallthru
      _
    %p161 = scmp.le.s32.totalorder 1, %s10
    %p162 = scmp.lt.s32.totalorder %s10, 3
    %p163 = pnand %p161, %p162
    %p164 = pneg %p163
    // Predicated region
    $region33: #{dense_block.1} parent=5 // pred_check
      _
    $region34: #{dense_block.1} parent=5 // pred_check_branch
      %166 = sbr.rel (%p163) target = $region36
    $region35: #{dense_block.1} parent=5 // pred_region
      %s167 = ssub.s32 %s10, 1
      %p168 = scmp.lt.s32.totalorder %s15, 1
      %s169 = scalar_select %p168, %s15, 1
      %s170 = smul.addr %s169, 2
      %s171 = smul.addr %s170, 4
      %s172 = scalar_lea.vmem %s0, %s171
      %p173 = pneg %p36
      %p174 = pneg %p33
      %p175 = pneg %p57
      %p176 = pneg %p54
      %p177 = pneg %p78
      %p178 = pneg %p75
      %p179 = pneg %p99
      %p180 = pneg %p96
      %p181 = pneg %p125
      %p182 = pneg %p122
      %p183 = scmp.lt.s32.totalorder %s15, 1
      %s184 = scalar_select %p183, %s15, 1
      %s185 = smul.addr %s184, 2
      %s186 = smul.addr %s185, 4
      %s187 = scalar_lea.vmem %s4, %s186
      %p188 = scmp.lt.s32.totalorder %s15, 1
      %s189 = scalar_select %p188, %s15, 1
      %s190 = smul.addr %s189, 2
      %s191 = smul.addr %s190, 4
      %s192 = scalar_lea.vmem %s0, %s191
      %p193 = scmp.lt.s32.totalorder %s15, 1
      %s194 = scalar_select %p193, %s15, 1
      %s195 = smul.addr %s194, 2
      %s196 = smul.addr %s195, 4
      %s197 = scalar_lea.vmem %s4, %s196
      %v198 = vld [vmem:[%s192] sm:$0xff]
      %v199 = vld [vmem:[%s3] sm:$0xff]
      %v200 = vld [vmem:[%s3 + $0x8] sm:$0xff]
      %v201 = vld [vmem:[%s3 + $0x10] sm:$0xff]
      %v202 = vld [vmem:[%s3 + $0x18] sm:$0xff]
      %v203 = vld [vmem:[%s3 + $0x20] sm:$0xff]
      %v204 = vld [vmem:[%s3 + $0x28] sm:$0xff]
      %v205 = vld [vmem:[%s3 + $0x30] sm:$0xff]
      %v206 = vld [vmem:[%s3 + $0x38] sm:$0xff]
      %v207 = vld [vmem:[%s3 + $0x40] sm:$0xf]
      %v208 = vld [vmem:[%s3 + $0x48] sm:$0xf]
      %v209 = vld [vmem:[%s1] sm:$0xff]
      %v210 = vld [vmem:[%s1 + $0x8] sm:$0xff]
      %v211 = vld [vmem:[%s1 + $0x10] sm:$0xf]
      %v213 = vcombine.high %v198, %v198
      %215 = vrot.lane.b32.xlu0 %v198, 17
      %v216 = vpop.permute.xlu0 %215
      %217 = vrot.lane.b32.xlu0 %v213, 17
      %v218 = vpop.permute.xlu0 %217
      %v219 = vlaneseq
      %v220 = vand.u32 %v219, 127
      %vm221 = vcmp.lt.s32.totalorder %v220, 17
      %v222 = vsel %vm221, %v216, %v218
      %v223 = vsel %vm221, %v218, %v216
      %224 = vrot.lane.b32.xlu0 %v198, 16
      %v225 = vpop.permute.xlu0 %224
      %226 = vrot.lane.b32.xlu0 %v213, 16
      %v227 = vpop.permute.xlu0 %226
      %vm228 = vcmp.lt.s32.totalorder %v220, 16
      %v229 = vsel %vm228, %v225, %v227
      %v230 = vsel %vm228, %v227, %v225
      %231 = vrot.lane.b32.xlu0 %v198, 15
      %v232 = vpop.permute.xlu0 %231
      %233 = vrot.lane.b32.xlu0 %v213, 15
      %v234 = vpop.permute.xlu0 %233
      %vm235 = vcmp.lt.s32.totalorder %v220, 15
      %v236 = vsel %vm235, %v232, %v234
      %v237 = vsel %vm235, %v234, %v232
      %238 = vrot.lane.b32.xlu0 %v198, 1
      %v239 = vpop.permute.xlu0 %238
      %240 = vrot.lane.b32.xlu0 %v213, 1
      %v241 = vpop.permute.xlu0 %240
      %vm242 = vcmp.lt.s32.totalorder %v220, 1
      %v243 = vsel %vm242, %v239, %v241
      %v244 = vsel %vm242, %v241, %v239
      %245 = vrot.lane.b32.xlu0 %v198, 127
      %v246 = vpop.permute.xlu0 %245
      %247 = vrot.lane.b32.xlu0 %v213, 127
      %v248 = vpop.permute.xlu0 %247
      %vm249 = vcmp.lt.s32.totalorder %v220, 127
      %v250 = vsel %vm249, %v246, %v248
      %v251 = vsel %vm249, %v248, %v246
      %252 = vrot.lane.b32.xlu0 %v198, 113
      %v253 = vpop.permute.xlu0 %252
      %254 = vrot.lane.b32.xlu0 %v213, 113
      %v255 = vpop.permute.xlu0 %254
      %vm256 = vcmp.lt.s32.totalorder %v220, 113
      %v257 = vsel %vm256, %v253, %v255
      %v258 = vsel %vm256, %v255, %v253
      %259 = vrot.lane.b32.xlu0 %v198, 112
      %v260 = vpop.permute.xlu0 %259
      %261 = vrot.lane.b32.xlu0 %v213, 112
      %v262 = vpop.permute.xlu0 %261
      %vm263 = vcmp.lt.s32.totalorder %v220, 112
      %v264 = vsel %vm263, %v260, %v262
      %v265 = vsel %vm263, %v262, %v260
      %266 = vrot.lane.b32.xlu0 %v198, 111
      %v267 = vpop.permute.xlu0 %266
      %268 = vrot.lane.b32.xlu0 %v213, 111
      %v269 = vpop.permute.xlu0 %268
      %vm270 = vcmp.lt.s32.totalorder %v220, 111
      %v271 = vsel %vm270, %v267, %v269
      %v272 = vsel %vm270, %v269, %v267
      %v275 = vrot.slane %v230, 4
      %v276 = vrot.slane %v229, 4
      %v281 = vrot.slane %v244, 4
      %v282 = vrot.slane %v243, 4
      %v287 = vrot.slane %v250, 4
      %v288 = vrot.slane %v251, 4
      %v293 = vrot.slane %v264, 4
      %v294 = vrot.slane %v265, 4
      %vm297 = vcmask 1043456
      %v298 = vsel %vm297, %v223, %v275
      %v299 = vsel %vm297, %v222, %v276
      %v300 = vsel %vm297, %v237, %v281
      %v301 = vsel %vm297, %v236, %v282
      %v302 = vsel %vm297, %v198, %v287
      %v303 = vsel %vm297, %v213, %v288
      %v304 = vsel %vm297, %v257, %v293
      %v305 = vsel %vm297, %v258, %v294
      %v306 = vmul.f32 %v298, %v199
      %v307 = vmul.f32 %v299, %v200
      %v308 = vmul.f32 %v300, %v201
      %v309 = vmul.f32 %v301, %v202
      %v310 = vmul.f32 %v302, %v203
      %v311 = vmul.f32 %v303, %v204
      %v312 = vmul.f32 %v304, %v205
      %v313 = vmul.f32 %v305, %v206
      %v314 = vmul.f32 %v271, %v207
      %v315 = vmul.f32 %v272, %v208
      %vm316 = vcmask 293888
      %v318 = vsel %vm316, %v209, 0
      %v321 = vsel %vm316, %v210, 0
      %v324 = vsel %vm316, %v211, 0
      %v327 = vsel %vm297, %v314, 0
      %v330 = vsel %vm297, %v315, 0
      %332 = vmatprep.subr.mxu0 0.0
      %333 = vmatpush1.msra.mxu0 0.0
      %334 = vmatprep.subr.mxu0 0.0
      %335 = vmatpush1.msra.mxu0 0.0
      %336 = vmatprep.subr.mxu0 0.0
      %337 = vmatpush1.msra.mxu0 0.0
      %338 = vmatprep.subr.mxu0 0.0
      %339 = vmatpush1.msra.mxu0 0.0
      %340 = vmatprep.subr.mxu0 0.0
      %341 = vmatpush1.msra.mxu0 0.0
      %342 = vmatprep.subr.mxu0 0.0
      %343 = vmatpush1.msra.mxu0 0.0
      %344 = vmatprep.subr.mxu0 0.0
      %345 = vmatpush1.msra.mxu0 0.0
      %346 = vmatprep.subr.mxu0 0.0
      %347 = vmatpush1.msra.mxu0 0.0
      %348 = vmatprep.subr.mxu0 0.0
      %349 = vmatpush1.msra.mxu0 0.0
      %350 = vmatprep.subr.mxu0 0.0
      %351 = vmatpush1.msra.mxu0 0.0
      %352 = vmatprep.subr.mxu0 0.0
      %353 = vmatpush1.msra.mxu0 0.0
      %354 = vmatprep.subr.mxu0 %v330
      %355 = vmatpush1.msra.mxu0 %v327
      %356 = vmatprep.subr.mxu0 %v313
      %357 = vmatpush1.msra.mxu0 %v312
      %358 = vmatprep.subr.mxu0 %v311
      %359 = vmatpush1.msra.mxu0 %v310
      %360 = vmatprep.subr.mxu0 %v309
      %361 = vmatpush1.msra.mxu0 %v308
      %362 = vmatprep.subr.mxu0 %v307
      %363 = vmatpush1.msra.mxu0 %v306
      %364 = vmatprep.subr.mxu0 0.0
      %365 = vmatpush2.msra.mxu0 0.0
      %366 = vmatprep.subr.mxu0 0.0
      %367 = vmatpush2.msra.mxu0 0.0
      %368 = vmatprep.subr.mxu0 0.0
      %369 = vmatpush2.msra.mxu0 0.0
      %370 = vmatprep.subr.mxu0 0.0
      %371 = vmatpush2.msra.mxu0 0.0
      %372 = vmatprep.subr.mxu0 0.0
      %373 = vmatpush2.msra.mxu0 0.0
      %374 = vmatprep.subr.mxu0 0.0
      %375 = vmatpush2.msra.mxu0 0.0
      %376 = vmatprep.subr.mxu0 0.0
      %377 = vmatpush2.msra.mxu0 0.0
      %378 = vmatprep.subr.mxu0 0.0
      %379 = vmatpush2.msra.mxu0 0.0
      %380 = vmatprep.subr.mxu0 0.0
      %381 = vmatpush2.msra.mxu0 0.0
      %382 = vmatprep.subr.mxu0 0.0
      %383 = vmatpush2.msra.mxu0 0.0
      %384 = vmatprep.subr.mxu0 0.0
      %385 = vmatpush2.msra.mxu0 0.0
      %386 = vmatprep.subr.mxu0 0.0
      %387 = vmatpush2.msra.mxu0 0.0
      %388 = vmatprep.subr.mxu0 0.0
      %389 = vmatpush2.msra.mxu0 0.0
      %390 = vmatprep.subr.mxu0 0.0
      %391 = vmatpush2.msra.mxu0 0.0
      %392 = vmatprep.subr.mxu0 0.0
      %393 = vmatpush2.msra.mxu0 0.0
      %394 = vmatprep.subr.mxu0 0.0
      %395 = vmatpush2.msra.mxu0 0.0
      %396 = vmatprep.mubr.f32.mxu0 0.0
      %397 = vmatmul.mubr.f32.gmra.mxu0 %v318
      %v398 = vpop.f32.mrf.mxu0
      %v399 = vadd.f32 0.0, %v398
      %v400 = vpop.f32.mrf.mxu0
      %v401 = vadd.f32 0.0, %v400
      %402 = vmatprep.mubr.f32.mxu0 0.0
      %403 = vmatmul.mubr.f32.gmra.mxu0 %v321
      %v404 = vpop.f32.mrf.mxu0
      %v405 = vadd.f32 0.0, %v404
      %v406 = vpop.f32.mrf.mxu0
      %v407 = vadd.f32 0.0, %v406
      %408 = vmatprep.mubr.f32.mxu0 0.0
      %409 = vmatmul.mubr.f32.gmra.mxu0 %v324
      %v410 = vpop.f32.mrf.mxu0
      %v411 = vadd.f32 0.0, %v410
      %v412 = vpop.f32.mrf.mxu0
      %v413 = vadd.f32 0.0, %v412
      %414 = vdwg.mxu0
      %v415 = vld [vmem:[%s2] sm:$0xf]
      %416 = vrot.lane.b32.xlu0 %v399, 17
      %v417 = vpop.permute.xlu0 %416
      %418 = vrot.lane.b32.xlu0 %v401, 17
      %v419 = vpop.permute.xlu0 %418
      %v420 = vsel %vm221, %v417, %v419
      %v421 = vsel %vm221, %v419, %v417
      %422 = vrot.lane.b32.xlu0 %v399, 16
      %v423 = vpop.permute.xlu0 %422
      %424 = vrot.lane.b32.xlu0 %v401, 16
      %v425 = vpop.permute.xlu0 %424
      %v426 = vsel %vm228, %v423, %v425
      %v427 = vsel %vm228, %v425, %v423
      %428 = vrot.lane.b32.xlu0 %v399, 15
      %v429 = vpop.permute.xlu0 %428
      %430 = vrot.lane.b32.xlu0 %v401, 15
      %v431 = vpop.permute.xlu0 %430
      %v432 = vsel %vm235, %v429, %v431
      %v433 = vsel %vm235, %v431, %v429
      %434 = vrot.lane.b32.xlu0 %v399, 1
      %v435 = vpop.permute.xlu0 %434
      %436 = vrot.lane.b32.xlu0 %v401, 1
      %v437 = vpop.permute.xlu0 %436
      %v438 = vsel %vm242, %v435, %v437
      %v439 = vsel %vm242, %v437, %v435
      %440 = vrot.lane.b32.xlu0 %v399, 127
      %v441 = vpop.permute.xlu0 %440
      %442 = vrot.lane.b32.xlu0 %v401, 127
      %v443 = vpop.permute.xlu0 %442
      %v444 = vsel %vm249, %v441, %v443
      %v445 = vsel %vm249, %v443, %v441
      %446 = vrot.lane.b32.xlu0 %v399, 113
      %v447 = vpop.permute.xlu0 %446
      %448 = vrot.lane.b32.xlu0 %v401, 113
      %v449 = vpop.permute.xlu0 %448
      %v450 = vsel %vm256, %v447, %v449
      %v451 = vsel %vm256, %v449, %v447
      %452 = vrot.lane.b32.xlu0 %v399, 112
      %v453 = vpop.permute.xlu0 %452
      %454 = vrot.lane.b32.xlu0 %v401, 112
      %v455 = vpop.permute.xlu0 %454
      %v456 = vsel %vm263, %v453, %v455
      %v457 = vsel %vm263, %v455, %v453
      %458 = vrot.lane.b32.xlu0 %v399, 111
      %v459 = vpop.permute.xlu0 %458
      %460 = vrot.lane.b32.xlu0 %v401, 111
      %v461 = vpop.permute.xlu0 %460
      %v462 = vsel %vm270, %v459, %v461
      %v463 = vsel %vm270, %v461, %v459
      %v466 = vrot.slane %v427, 4
      %v467 = vrot.slane %v426, 4
      %v472 = vrot.slane %v439, 4
      %v473 = vrot.slane %v438, 4
      %v478 = vrot.slane %v444, 4
      %v479 = vrot.slane %v445, 4
      %v484 = vrot.slane %v456, 4
      %v485 = vrot.slane %v457, 4
      %v488 = vsel %vm297, %v421, %v466
      %v489 = vsel %vm297, %v420, %v467
      %v490 = vsel %vm297, %v433, %v472
      %v491 = vsel %vm297, %v432, %v473
      %v492 = vsel %vm297, %v399, %v478
      %v493 = vsel %vm297, %v401, %v479
      %v494 = vsel %vm297, %v450, %v484
      %v495 = vsel %vm297, %v451, %v485
      %v496 = vmul.f32 %v488, %v199
      %v497 = vmul.f32 %v489, %v200
      %v498 = vmul.f32 %v490, %v201
      %v499 = vmul.f32 %v491, %v202
      %v500 = vmul.f32 %v492, %v203
      %v501 = vmul.f32 %v493, %v204
      %v502 = vmul.f32 %v494, %v205
      %v503 = vmul.f32 %v495, %v206
      %v504 = vmul.f32 %v462, %v207
      %v505 = vmul.f32 %v463, %v208
      %v507 = vsel %vm316, %v415, 0
      %v510 = vsel %vm297, %v504, 0
      %v513 = vsel %vm297, %v505, 0
      %515 = vmatprep.subr.mxu0 0.0
      %516 = vmatpush1.msra.mxu0 0.0
      %517 = vmatprep.subr.mxu0 0.0
      %518 = vmatpush1.msra.mxu0 0.0
      %519 = vmatprep.subr.mxu0 0.0
      %520 = vmatpush1.msra.mxu0 0.0
      %521 = vmatprep.subr.mxu0 0.0
      %522 = vmatpush1.msra.mxu0 0.0
      %523 = vmatprep.subr.mxu0 0.0
      %524 = vmatpush1.msra.mxu0 0.0
      %525 = vmatprep.subr.mxu0 0.0
      %526 = vmatpush1.msra.mxu0 0.0
      %527 = vmatprep.subr.mxu0 0.0
      %528 = vmatpush1.msra.mxu0 0.0
      %529 = vmatprep.subr.mxu0 0.0
      %530 = vmatpush1.msra.mxu0 0.0
      %531 = vmatprep.subr.mxu0 0.0
      %532 = vmatpush1.msra.mxu0 0.0
      %533 = vmatprep.subr.mxu0 0.0
      %534 = vmatpush1.msra.mxu0 0.0
      %535 = vmatprep.subr.mxu0 0.0
      %536 = vmatpush1.msra.mxu0 0.0
      %537 = vmatprep.subr.mxu0 %v513
      %538 = vmatpush1.msra.mxu0 %v510
      %539 = vmatprep.subr.mxu0 %v503
      %540 = vmatpush1.msra.mxu0 %v502
      %541 = vmatprep.subr.mxu0 %v501
      %542 = vmatpush1.msra.mxu0 %v500
      %543 = vmatprep.subr.mxu0 %v499
      %544 = vmatpush1.msra.mxu0 %v498
      %545 = vmatprep.subr.mxu0 %v497
      %546 = vmatpush1.msra.mxu0 %v496
      %547 = vmatprep.subr.mxu0 0.0
      %548 = vmatpush2.msra.mxu0 0.0
      %549 = vmatprep.subr.mxu0 0.0
      %550 = vmatpush2.msra.mxu0 0.0
      %551 = vmatprep.subr.mxu0 0.0
      %552 = vmatpush2.msra.mxu0 0.0
      %553 = vmatprep.subr.mxu0 0.0
      %554 = vmatpush2.msra.mxu0 0.0
      %555 = vmatprep.subr.mxu0 0.0
      %556 = vmatpush2.msra.mxu0 0.0
      %557 = vmatprep.subr.mxu0 0.0
      %558 = vmatpush2.msra.mxu0 0.0
      %559 = vmatprep.subr.mxu0 0.0
      %560 = vmatpush2.msra.mxu0 0.0
      %561 = vmatprep.subr.mxu0 0.0
      %562 = vmatpush2.msra.mxu0 0.0
      %563 = vmatprep.subr.mxu0 0.0
      %564 = vmatpush2.msra.mxu0 0.0
      %565 = vmatprep.subr.mxu0 0.0
      %566 = vmatpush2.msra.mxu0 0.0
      %567 = vmatprep.subr.mxu0 0.0
      %568 = vmatpush2.msra.mxu0 0.0
      %569 = vmatprep.subr.mxu0 0.0
      %570 = vmatpush2.msra.mxu0 0.0
      %571 = vmatprep.subr.mxu0 0.0
      %572 = vmatpush2.msra.mxu0 0.0
      %573 = vmatprep.subr.mxu0 0.0
      %574 = vmatpush2.msra.mxu0 0.0
      %575 = vmatprep.subr.mxu0 0.0
      %576 = vmatpush2.msra.mxu0 0.0
      %577 = vmatprep.subr.mxu0 0.0
      %578 = vmatpush2.msra.mxu0 0.0
      %579 = vmatprep.mubr.f32.mxu0 0.0
      %580 = vmatmul.mubr.f32.gmra.mxu0 %v507
      %v581 = vpop.f32.mrf.mxu0
      %v582 = vadd.f32 0.0, %v581
      %v583 = vpop.f32.mrf.mxu0
      %v584 = vadd.f32 0.0, %v583
      %585 = vdwg.mxu0
      %v588 = vrot.slane %v582, 4
      %v589 = vrot.slane %v584, 4
      %v592 = vadd.f32 %v399, %v588
      %v593 = vadd.f32 %v401, %v589
      %s594 = scalar_lea.vmem %s2, 4
      %v595 = vld [vmem:[%s594] sm:$0xf]
      %v598 = vrot.slane %v592, 4
      %v599 = vrot.slane %v593, 4
      %602 = vrot.lane.b32.xlu0 %v598, 17
      %v603 = vpop.permute.xlu0 %602
      %604 = vrot.lane.b32.xlu0 %v599, 17
      %v605 = vpop.permute.xlu0 %604
      %v606 = vsel %vm221, %v603, %v605
      %v607 = vsel %vm221, %v605, %v603
      %608 = vrot.lane.b32.xlu0 %v598, 16
      %v609 = vpop.permute.xlu0 %608
      %610 = vrot.lane.b32.xlu0 %v599, 16
      %v611 = vpop.permute.xlu0 %610
      %v612 = vsel %vm228, %v609, %v611
      %v613 = vsel %vm228, %v611, %v609
      %614 = vrot.lane.b32.xlu0 %v598, 15
      %v615 = vpop.permute.xlu0 %614
      %616 = vrot.lane.b32.xlu0 %v599, 15
      %v617 = vpop.permute.xlu0 %616
      %v618 = vsel %vm235, %v615, %v617
      %v619 = vsel %vm235, %v617, %v615
      %620 = vrot.lane.b32.xlu0 %v598, 1
      %v621 = vpop.permute.xlu0 %620
      %622 = vrot.lane.b32.xlu0 %v599, 1
      %v623 = vpop.permute.xlu0 %622
      %v624 = vsel %vm242, %v621, %v623
      %v625 = vsel %vm242, %v623, %v621
      %626 = vrot.lane.b32.xlu0 %v598, 127
      %v627 = vpop.permute.xlu0 %626
      %628 = vrot.lane.b32.xlu0 %v599, 127
      %v629 = vpop.permute.xlu0 %628
      %v630 = vsel %vm249, %v627, %v629
      %v631 = vsel %vm249, %v629, %v627
      %632 = vrot.lane.b32.xlu0 %v598, 113
      %v633 = vpop.permute.xlu0 %632
      %634 = vrot.lane.b32.xlu0 %v599, 113
      %v635 = vpop.permute.xlu0 %634
      %v636 = vsel %vm256, %v633, %v635
      %v637 = vsel %vm256, %v635, %v633
      %638 = vrot.lane.b32.xlu0 %v598, 112
      %v639 = vpop.permute.xlu0 %638
      %640 = vrot.lane.b32.xlu0 %v599, 112
      %v641 = vpop.permute.xlu0 %640
      %v642 = vsel %vm263, %v639, %v641
      %v643 = vsel %vm263, %v641, %v639
      %644 = vrot.lane.b32.xlu0 %v598, 111
      %v645 = vpop.permute.xlu0 %644
      %646 = vrot.lane.b32.xlu0 %v599, 111
      %v647 = vpop.permute.xlu0 %646
      %v648 = vsel %vm270, %v645, %v647
      %v649 = vsel %vm270, %v647, %v645
      %v652 = vrot.slane %v613, 4
      %v653 = vrot.slane %v612, 4
      %v658 = vrot.slane %v625, 4
      %v659 = vrot.slane %v624, 4
      %v664 = vrot.slane %v630, 4
      %v665 = vrot.slane %v631, 4
      %v670 = vrot.slane %v642, 4
      %v671 = vrot.slane %v643, 4
      %v674 = vsel %vm297, %v607, %v652
      %v675 = vsel %vm297, %v606, %v653
      %v676 = vsel %vm297, %v619, %v658
      %v677 = vsel %vm297, %v618, %v659
      %v678 = vsel %vm297, %v598, %v664
      %v679 = vsel %vm297, %v599, %v665
      %v680 = vsel %vm297, %v636, %v670
      %v681 = vsel %vm297, %v637, %v671
      %v682 = vmul.f32 %v674, %v199
      %v683 = vmul.f32 %v675, %v200
      %v684 = vmul.f32 %v676, %v201
      %v685 = vmul.f32 %v677, %v202
      %v686 = vmul.f32 %v678, %v203
      %v687 = vmul.f32 %v679, %v204
      %v688 = vmul.f32 %v680, %v205
      %v689 = vmul.f32 %v681, %v206
      %v690 = vmul.f32 %v648, %v207
      %v691 = vmul.f32 %v649, %v208
      %v693 = vsel %vm316, %v595, 0
      %v696 = vsel %vm297, %v690, 0
      %v699 = vsel %vm297, %v691, 0
      %701 = vmatprep.subr.mxu0 0.0
      %702 = vmatpush1.msra.mxu0 0.0
      %703 = vmatprep.subr.mxu0 0.0
      %704 = vmatpush1.msra.mxu0 0.0
      %705 = vmatprep.subr.mxu0 0.0
      %706 = vmatpush1.msra.mxu0 0.0
      %707 = vmatprep.subr.mxu0 0.0
      %708 = vmatpush1.msra.mxu0 0.0
      %709 = vmatprep.subr.mxu0 0.0
      %710 = vmatpush1.msra.mxu0 0.0
      %711 = vmatprep.subr.mxu0 0.0
      %712 = vmatpush1.msra.mxu0 0.0
      %713 = vmatprep.subr.mxu0 0.0
      %714 = vmatpush1.msra.mxu0 0.0
      %715 = vmatprep.subr.mxu0 0.0
      %716 = vmatpush1.msra.mxu0 0.0
      %717 = vmatprep.subr.mxu0 0.0
      %718 = vmatpush1.msra.mxu0 0.0
      %719 = vmatprep.subr.mxu0 0.0
      %720 = vmatpush1.msra.mxu0 0.0
      %721 = vmatprep.subr.mxu0 0.0
      %722 = vmatpush1.msra.mxu0 0.0
      %723 = vmatprep.subr.mxu0 %v699
      %724 = vmatpush1.msra.mxu0 %v696
      %725 = vmatprep.subr.mxu0 %v689
      %726 = vmatpush1.msra.mxu0 %v688
      %727 = vmatprep.subr.mxu0 %v687
      %728 = vmatpush1.msra.mxu0 %v686
      %729 = vmatprep.subr.mxu0 %v685
      %730 = vmatpush1.msra.mxu0 %v684
      %731 = vmatprep.subr.mxu0 %v683
      %732 = vmatpush1.msra.mxu0 %v682
      %733 = vmatprep.subr.mxu0 0.0
      %734 = vmatpush2.msra.mxu0 0.0
      %735 = vmatprep.subr.mxu0 0.0
      %736 = vmatpush2.msra.mxu0 0.0
      %737 = vmatprep.subr.mxu0 0.0
      %738 = vmatpush2.msra.mxu0 0.0
      %739 = vmatprep.subr.mxu0 0.0
      %740 = vmatpush2.msra.mxu0 0.0
      %741 = vmatprep.subr.mxu0 0.0
      %742 = vmatpush2.msra.mxu0 0.0
      %743 = vmatprep.subr.mxu0 0.0
      %744 = vmatpush2.msra.mxu0 0.0
      %745 = vmatprep.subr.mxu0 0.0
      %746 = vmatpush2.msra.mxu0 0.0
      %747 = vmatprep.subr.mxu0 0.0
      %748 = vmatpush2.msra.mxu0 0.0
      %749 = vmatprep.subr.mxu0 0.0
      %750 = vmatpush2.msra.mxu0 0.0
      %751 = vmatprep.subr.mxu0 0.0
      %752 = vmatpush2.msra.mxu0 0.0
      %753 = vmatprep.subr.mxu0 0.0
      %754 = vmatpush2.msra.mxu0 0.0
      %755 = vmatprep.subr.mxu0 0.0
      %756 = vmatpush2.msra.mxu0 0.0
      %757 = vmatprep.subr.mxu0 0.0
      %758 = vmatpush2.msra.mxu0 0.0
      %759 = vmatprep.subr.mxu0 0.0
      %760 = vmatpush2.msra.mxu0 0.0
      %761 = vmatprep.subr.mxu0 0.0
      %762 = vmatpush2.msra.mxu0 0.0
      %763 = vmatprep.subr.mxu0 0.0
      %764 = vmatpush2.msra.mxu0 0.0
      %765 = vmatprep.mubr.f32.mxu0 0.0
      %766 = vmatmul.mubr.f32.gmra.mxu0 %v693
      %v767 = vpop.f32.mrf.mxu0
      %v768 = vadd.f32 0.0, %v767
      %v769 = vpop.f32.mrf.mxu0
      %v770 = vadd.f32 0.0, %v769
      %771 = vdwg.mxu0
      %v772 = vadd.f32 %v405, %v768
      %v773 = vadd.f32 %v407, %v770
      %s774 = scalar_lea.vmem %s2, 8
      %v775 = vld [vmem:[%s774] sm:$0xf]
      %776 = vrot.lane.b32.xlu0 %v772, 17
      %v777 = vpop.permute.xlu0 %776
      %778 = vrot.lane.b32.xlu0 %v773, 17
      %v779 = vpop.permute.xlu0 %778
      %v780 = vsel %vm221, %v777, %v779
      %v781 = vsel %vm221, %v779, %v777
      %782 = vrot.lane.b32.xlu0 %v772, 16
      %v783 = vpop.permute.xlu0 %782
      %784 = vrot.lane.b32.xlu0 %v773, 16
      %v785 = vpop.permute.xlu0 %784
      %v786 = vsel %vm228, %v783, %v785
      %v787 = vsel %vm228, %v785, %v783
      %788 = vrot.lane.b32.xlu0 %v772, 15
      %v789 = vpop.permute.xlu0 %788
      %790 = vrot.lane.b32.xlu0 %v773, 15
      %v791 = vpop.permute.xlu0 %790
      %v792 = vsel %vm235, %v789, %v791
      %v793 = vsel %vm235, %v791, %v789
      %794 = vrot.lane.b32.xlu0 %v772, 1
      %v795 = vpop.permute.xlu0 %794
      %796 = vrot.lane.b32.xlu0 %v773, 1
      %v797 = vpop.permute.xlu0 %796
      %v798 = vsel %vm242, %v795, %v797
      %v799 = vsel %vm242, %v797, %v795
      %800 = vrot.lane.b32.xlu0 %v772, 127
      %v801 = vpop.permute.xlu0 %800
      %802 = vrot.lane.b32.xlu0 %v773, 127
      %v803 = vpop.permute.xlu0 %802
      %v804 = vsel %vm249, %v801, %v803
      %v805 = vsel %vm249, %v803, %v801
      %806 = vrot.lane.b32.xlu0 %v772, 113
      %v807 = vpop.permute.xlu0 %806
      %808 = vrot.lane.b32.xlu0 %v773, 113
      %v809 = vpop.permute.xlu0 %808
      %v810 = vsel %vm256, %v807, %v809
      %v811 = vsel %vm256, %v809, %v807
      %812 = vrot.lane.b32.xlu0 %v772, 112
      %v813 = vpop.permute.xlu0 %812
      %814 = vrot.lane.b32.xlu0 %v773, 112
      %v815 = vpop.permute.xlu0 %814
      %v816 = vsel %vm263, %v813, %v815
      %v817 = vsel %vm263, %v815, %v813
      %818 = vrot.lane.b32.xlu0 %v772, 111
      %v819 = vpop.permute.xlu0 %818
      %820 = vrot.lane.b32.xlu0 %v773, 111
      %v821 = vpop.permute.xlu0 %820
      %v822 = vsel %vm270, %v819, %v821
      %v823 = vsel %vm270, %v821, %v819
      %v826 = vrot.slane %v787, 4
      %v827 = vrot.slane %v786, 4
      %v832 = vrot.slane %v799, 4
      %v833 = vrot.slane %v798, 4
      %v838 = vrot.slane %v804, 4
      %v839 = vrot.slane %v805, 4
      %v844 = vrot.slane %v816, 4
      %v845 = vrot.slane %v817, 4
      %v848 = vsel %vm297, %v781, %v826
      %v849 = vsel %vm297, %v780, %v827
      %v850 = vsel %vm297, %v793, %v832
      %v851 = vsel %vm297, %v792, %v833
      %v852 = vsel %vm297, %v772, %v838
      %v853 = vsel %vm297, %v773, %v839
      %v854 = vsel %vm297, %v810, %v844
      %v855 = vsel %vm297, %v811, %v845
      %v856 = vmul.f32 %v848, %v199
      %v857 = vmul.f32 %v849, %v200
      %v858 = vmul.f32 %v850, %v201
      %v859 = vmul.f32 %v851, %v202
      %v860 = vmul.f32 %v852, %v203
      %v861 = vmul.f32 %v853, %v204
      %v862 = vmul.f32 %v854, %v205
      %v863 = vmul.f32 %v855, %v206
      %v864 = vmul.f32 %v822, %v207
      %v865 = vmul.f32 %v823, %v208
      %v867 = vsel %vm316, %v775, 0
      %v870 = vsel %vm297, %v864, 0
      %v873 = vsel %vm297, %v865, 0
      %875 = vmatprep.subr.mxu0 0.0
      %876 = vmatpush1.msra.mxu0 0.0
      %877 = vmatprep.subr.mxu0 0.0
      %878 = vmatpush1.msra.mxu0 0.0
      %879 = vmatprep.subr.mxu0 0.0
      %880 = vmatpush1.msra.mxu0 0.0
      %881 = vmatprep.subr.mxu0 0.0
      %882 = vmatpush1.msra.mxu0 0.0
      %883 = vmatprep.subr.mxu0 0.0
      %884 = vmatpush1.msra.mxu0 0.0
      %885 = vmatprep.subr.mxu0 0.0
      %886 = vmatpush1.msra.mxu0 0.0
      %887 = vmatprep.subr.mxu0 0.0
      %888 = vmatpush1.msra.mxu0 0.0
      %889 = vmatprep.subr.mxu0 0.0
      %890 = vmatpush1.msra.mxu0 0.0
      %891 = vmatprep.subr.mxu0 0.0
      %892 = vmatpush1.msra.mxu0 0.0
      %893 = vmatprep.subr.mxu0 0.0
      %894 = vmatpush1.msra.mxu0 0.0
      %895 = vmatprep.subr.mxu0 0.0
      %896 = vmatpush1.msra.mxu0 0.0
      %897 = vmatprep.subr.mxu0 %v873
      %898 = vmatpush1.msra.mxu0 %v870
      %899 = vmatprep.subr.mxu0 %v863
      %900 = vmatpush1.msra.mxu0 %v862
      %901 = vmatprep.subr.mxu0 %v861
      %902 = vmatpush1.msra.mxu0 %v860
      %903 = vmatprep.subr.mxu0 %v859
      %904 = vmatpush1.msra.mxu0 %v858
      %905 = vmatprep.subr.mxu0 %v857
      %906 = vmatpush1.msra.mxu0 %v856
      %907 = vmatprep.subr.mxu0 0.0
      %908 = vmatpush2.msra.mxu0 0.0
      %909 = vmatprep.subr.mxu0 0.0
      %910 = vmatpush2.msra.mxu0 0.0
      %911 = vmatprep.subr.mxu0 0.0
      %912 = vmatpush2.msra.mxu0 0.0
      %913 = vmatprep.subr.mxu0 0.0
      %914 = vmatpush2.msra.mxu0 0.0
      %915 = vmatprep.subr.mxu0 0.0
      %916 = vmatpush2.msra.mxu0 0.0
      %917 = vmatprep.subr.mxu0 0.0
      %918 = vmatpush2.msra.mxu0 0.0
      %919 = vmatprep.subr.mxu0 0.0
      %920 = vmatpush2.msra.mxu0 0.0
      %921 = vmatprep.subr.mxu0 0.0
      %922 = vmatpush2.msra.mxu0 0.0
      %923 = vmatprep.subr.mxu0 0.0
      %924 = vmatpush2.msra.mxu0 0.0
      %925 = vmatprep.subr.mxu0 0.0
      %926 = vmatpush2.msra.mxu0 0.0
      %927 = vmatprep.subr.mxu0 0.0
      %928 = vmatpush2.msra.mxu0 0.0
      %929 = vmatprep.subr.mxu0 0.0
      %930 = vmatpush2.msra.mxu0 0.0
      %931 = vmatprep.subr.mxu0 0.0
      %932 = vmatpush2.msra.mxu0 0.0
      %933 = vmatprep.subr.mxu0 0.0
      %934 = vmatpush2.msra.mxu0 0.0
      %935 = vmatprep.subr.mxu0 0.0
      %936 = vmatpush2.msra.mxu0 0.0
      %937 = vmatprep.subr.mxu0 0.0
      %938 = vmatpush2.msra.mxu0 0.0
      %939 = vmatprep.mubr.f32.mxu0 0.0
      %940 = vmatmul.mubr.f32.gmra.mxu0 %v867
      %v941 = vpop.f32.mrf.mxu0
      %v942 = vadd.f32 0.0, %v941
      %v943 = vpop.f32.mrf.mxu0
      %v944 = vadd.f32 0.0, %v943
      %945 = vdwg.mxu0
      %v948 = vrot.slane %v942, 4
      %v949 = vrot.slane %v944, 4
      %v952 = vadd.f32 %v405, %v948
      %v953 = vadd.f32 %v407, %v949
      %s954 = scalar_lea.vmem %s2, 12
      %v955 = vld [vmem:[%s954] sm:$0xf]
      %v958 = vrot.slane %v952, 4
      %v959 = vrot.slane %v953, 4
      %962 = vrot.lane.b32.xlu0 %v958, 17
      %v963 = vpop.permute.xlu0 %962
      %964 = vrot.lane.b32.xlu0 %v959, 17
      %v965 = vpop.permute.xlu0 %964
      %v966 = vsel %vm221, %v963, %v965
      %v967 = vsel %vm221, %v965, %v963
      %968 = vrot.lane.b32.xlu0 %v958, 16
      %v969 = vpop.permute.xlu0 %968
      %970 = vrot.lane.b32.xlu0 %v959, 16
      %v971 = vpop.permute.xlu0 %970
      %v972 = vsel %vm228, %v969, %v971
      %v973 = vsel %vm228, %v971, %v969
      %974 = vrot.lane.b32.xlu0 %v958, 15
      %v975 = vpop.permute.xlu0 %974
      %976 = vrot.lane.b32.xlu0 %v959, 15
      %v977 = vpop.permute.xlu0 %976
      %v978 = vsel %vm235, %v975, %v977
      %v979 = vsel %vm235, %v977, %v975
      %980 = vrot.lane.b32.xlu0 %v958, 1
      %v981 = vpop.permute.xlu0 %980
      %982 = vrot.lane.b32.xlu0 %v959, 1
      %v983 = vpop.permute.xlu0 %982
      %v984 = vsel %vm242, %v981, %v983
      %v985 = vsel %vm242, %v983, %v981
      %986 = vrot.lane.b32.xlu0 %v958, 127
      %v987 = vpop.permute.xlu0 %986
      %988 = vrot.lane.b32.xlu0 %v959, 127
      %v989 = vpop.permute.xlu0 %988
      %v990 = vsel %vm249, %v987, %v989
      %v991 = vsel %vm249, %v989, %v987
      %992 = vrot.lane.b32.xlu0 %v958, 113
      %v993 = vpop.permute.xlu0 %992
      %994 = vrot.lane.b32.xlu0 %v959, 113
      %v995 = vpop.permute.xlu0 %994
      %v996 = vsel %vm256, %v993, %v995
      %v997 = vsel %vm256, %v995, %v993
      %998 = vrot.lane.b32.xlu0 %v958, 112
      %v999 = vpop.permute.xlu0 %998
      %1000 = vrot.lane.b32.xlu0 %v959, 112
      %v1001 = vpop.permute.xlu0 %1000
      %v1002 = vsel %vm263, %v999, %v1001
      %v1003 = vsel %vm263, %v1001, %v999
      %1004 = vrot.lane.b32.xlu0 %v958, 111
      %v1005 = vpop.permute.xlu0 %1004
      %1006 = vrot.lane.b32.xlu0 %v959, 111
      %v1007 = vpop.permute.xlu0 %1006
      %v1008 = vsel %vm270, %v1005, %v1007
      %v1009 = vsel %vm270, %v1007, %v1005
      %v1012 = vrot.slane %v973, 4
      %v1013 = vrot.slane %v972, 4
      %v1018 = vrot.slane %v985, 4
      %v1019 = vrot.slane %v984, 4
      %v1024 = vrot.slane %v990, 4
      %v1025 = vrot.slane %v991, 4
      %v1030 = vrot.slane %v1002, 4
      %v1031 = vrot.slane %v1003, 4
      %v1034 = vsel %vm297, %v967, %v1012
      %v1035 = vsel %vm297, %v966, %v1013
      %v1036 = vsel %vm297, %v979, %v1018
      %v1037 = vsel %vm297, %v978, %v1019
      %v1038 = vsel %vm297, %v958, %v1024
      %v1039 = vsel %vm297, %v959, %v1025
      %v1040 = vsel %vm297, %v996, %v1030
      %v1041 = vsel %vm297, %v997, %v1031
      %v1042 = vmul.f32 %v1034, %v199
      %v1043 = vmul.f32 %v1035, %v200
      %v1044 = vmul.f32 %v1036, %v201
      %v1045 = vmul.f32 %v1037, %v202
      %v1046 = vmul.f32 %v1038, %v203
      %v1047 = vmul.f32 %v1039, %v204
      %v1048 = vmul.f32 %v1040, %v205
      %v1049 = vmul.f32 %v1041, %v206
      %v1050 = vmul.f32 %v1008, %v207
      %v1051 = vmul.f32 %v1009, %v208
      %v1053 = vsel %vm316, %v955, 0
      %v1056 = vsel %vm297, %v1050, 0
      %v1059 = vsel %vm297, %v1051, 0
      %1061 = vmatprep.subr.mxu0 0.0
      %1062 = vmatpush1.msra.mxu0 0.0
      %1063 = vmatprep.subr.mxu0 0.0
      %1064 = vmatpush1.msra.mxu0 0.0
      %1065 = vmatprep.subr.mxu0 0.0
      %1066 = vmatpush1.msra.mxu0 0.0
      %1067 = vmatprep.subr.mxu0 0.0
      %1068 = vmatpush1.msra.mxu0 0.0
      %1069 = vmatprep.subr.mxu0 0.0
      %1070 = vmatpush1.msra.mxu0 0.0
      %1071 = vmatprep.subr.mxu0 0.0
      %1072 = vmatpush1.msra.mxu0 0.0
      %1073 = vmatprep.subr.mxu0 0.0
      %1074 = vmatpush1.msra.mxu0 0.0
      %1075 = vmatprep.subr.mxu0 0.0
      %1076 = vmatpush1.msra.mxu0 0.0
      %1077 = vmatprep.subr.mxu0 0.0
      %1078 = vmatpush1.msra.mxu0 0.0
      %1079 = vmatprep.subr.mxu0 0.0
      %1080 = vmatpush1.msra.mxu0 0.0
      %1081 = vmatprep.subr.mxu0 0.0
      %1082 = vmatpush1.msra.mxu0 0.0
      %1083 = vmatprep.subr.mxu0 %v1059
      %1084 = vmatpush1.msra.mxu0 %v1056
      %1085 = vmatprep.subr.mxu0 %v1049
      %1086 = vmatpush1.msra.mxu0 %v1048
      %1087 = vmatprep.subr.mxu0 %v1047
      %1088 = vmatpush1.msra.mxu0 %v1046
      %1089 = vmatprep.subr.mxu0 %v1045
      %1090 = vmatpush1.msra.mxu0 %v1044
      %1091 = vmatprep.subr.mxu0 %v1043
      %1092 = vmatpush1.msra.mxu0 %v1042
      %1093 = vmatprep.subr.mxu0 0.0
      %1094 = vmatpush2.msra.mxu0 0.0
      %1095 = vmatprep.subr.mxu0 0.0
      %1096 = vmatpush2.msra.mxu0 0.0
      %1097 = vmatprep.subr.mxu0 0.0
      %1098 = vmatpush2.msra.mxu0 0.0
      %1099 = vmatprep.subr.mxu0 0.0
      %1100 = vmatpush2.msra.mxu0 0.0
      %1101 = vmatprep.subr.mxu0 0.0
      %1102 = vmatpush2.msra.mxu0 0.0
      %1103 = vmatprep.subr.mxu0 0.0
      %1104 = vmatpush2.msra.mxu0 0.0
      %1105 = vmatprep.subr.mxu0 0.0
      %1106 = vmatpush2.msra.mxu0 0.0
      %1107 = vmatprep.subr.mxu0 0.0
      %1108 = vmatpush2.msra.mxu0 0.0
      %1109 = vmatprep.subr.mxu0 0.0
      %1110 = vmatpush2.msra.mxu0 0.0
      %1111 = vmatprep.subr.mxu0 0.0
      %1112 = vmatpush2.msra.mxu0 0.0
      %1113 = vmatprep.subr.mxu0 0.0
      %1114 = vmatpush2.msra.mxu0 0.0
      %1115 = vmatprep.subr.mxu0 0.0
      %1116 = vmatpush2.msra.mxu0 0.0
      %1117 = vmatprep.subr.mxu0 0.0
      %1118 = vmatpush2.msra.mxu0 0.0
      %1119 = vmatprep.subr.mxu0 0.0
      %1120 = vmatpush2.msra.mxu0 0.0
      %1121 = vmatprep.subr.mxu0 0.0
      %1122 = vmatpush2.msra.mxu0 0.0
      %1123 = vmatprep.subr.mxu0 0.0
      %1124 = vmatpush2.msra.mxu0 0.0
      %1125 = vmatprep.mubr.f32.mxu0 0.0
      %1126 = vmatmul.mubr.f32.gmra.mxu0 %v1053
      %v1127 = vpop.f32.mrf.mxu0
      %v1128 = vadd.f32 0.0, %v1127
      %v1129 = vpop.f32.mrf.mxu0
      %v1130 = vadd.f32 0.0, %v1129
      %1131 = vdwg.mxu0
      %v1132 = vadd.f32 %v411, %v1128
      %v1133 = vadd.f32 %v413, %v1130
      %v1134 = vadd.f32 %v1132, %v198
      %v1135 = vadd.f32 %v1133, %v213
      %s1136 = scalar_lea.vmem %s2, 16
      %v1137 = vld [vmem:[%s1136] sm:$0xf]
      %1138 = vrot.lane.b32.xlu0 %v1134, 17
      %v1139 = vpop.permute.xlu0 %1138
      %1140 = vrot.lane.b32.xlu0 %v1135, 17
      %v1141 = vpop.permute.xlu0 %1140
      %v1142 = vsel %vm221, %v1139, %v1141
      %v1143 = vsel %vm221, %v1141, %v1139
      %1144 = vrot.lane.b32.xlu0 %v1134, 16
      %v1145 = vpop.permute.xlu0 %1144
      %1146 = vrot.lane.b32.xlu0 %v1135, 16
      %v1147 = vpop.permute.xlu0 %1146
      %v1148 = vsel %vm228, %v1145, %v1147
      %v1149 = vsel %vm228, %v1147, %v1145
      %1150 = vrot.lane.b32.xlu0 %v1134, 15
      %v1151 = vpop.permute.xlu0 %1150
      %1152 = vrot.lane.b32.xlu0 %v1135, 15
      %v1153 = vpop.permute.xlu0 %1152
      %v1154 = vsel %vm235, %v1151, %v1153
      %v1155 = vsel %vm235, %v1153, %v1151
      %1156 = vrot.lane.b32.xlu0 %v1134, 1
      %v1157 = vpop.permute.xlu0 %1156
      %1158 = vrot.lane.b32.xlu0 %v1135, 1
      %v1159 = vpop.permute.xlu0 %1158
      %v1160 = vsel %vm242, %v1157, %v1159
      %v1161 = vsel %vm242, %v1159, %v1157
      %1162 = vrot.lane.b32.xlu0 %v1134, 127
      %v1163 = vpop.permute.xlu0 %1162
      %1164 = vrot.lane.b32.xlu0 %v1135, 127
      %v1165 = vpop.permute.xlu0 %1164
      %v1166 = vsel %vm249, %v1163, %v1165
      %v1167 = vsel %vm249, %v1165, %v1163
      %1168 = vrot.lane.b32.xlu0 %v1134, 113
      %v1169 = vpop.permute.xlu0 %1168
      %1170 = vrot.lane.b32.xlu0 %v1135, 113
      %v1171 = vpop.permute.xlu0 %1170
      %v1172 = vsel %vm256, %v1169, %v1171
      %v1173 = vsel %vm256, %v1171, %v1169
      %1174 = vrot.lane.b32.xlu0 %v1134, 112
      %v1175 = vpop.permute.xlu0 %1174
      %1176 = vrot.lane.b32.xlu0 %v1135, 112
      %v1177 = vpop.permute.xlu0 %1176
      %v1178 = vsel %vm263, %v1175, %v1177
      %v1179 = vsel %vm263, %v1177, %v1175
      %1180 = vrot.lane.b32.xlu0 %v1134, 111
      %v1181 = vpop.permute.xlu0 %1180
      %1182 = vrot.lane.b32.xlu0 %v1135, 111
      %v1183 = vpop.permute.xlu0 %1182
      %v1184 = vsel %vm270, %v1181, %v1183
      %v1185 = vsel %vm270, %v1183, %v1181
      %v1188 = vrot.slane %v1149, 4
      %v1189 = vrot.slane %v1148, 4
      %v1194 = vrot.slane %v1161, 4
      %v1195 = vrot.slane %v1160, 4
      %v1200 = vrot.slane %v1166, 4
      %v1201 = vrot.slane %v1167, 4
      %v1206 = vrot.slane %v1178, 4
      %v1207 = vrot.slane %v1179, 4
      %v1210 = vsel %vm297, %v1143, %v1188
      %v1211 = vsel %vm297, %v1142, %v1189
      %v1212 = vsel %vm297, %v1155, %v1194
      %v1213 = vsel %vm297, %v1154, %v1195
      %v1214 = vsel %vm297, %v1134, %v1200
      %v1215 = vsel %vm297, %v1135, %v1201
      %v1216 = vsel %vm297, %v1172, %v1206
      %v1217 = vsel %vm297, %v1173, %v1207
      %v1218 = vmul.f32 %v1210, %v199
      %v1219 = vmul.f32 %v1211, %v200
      %v1220 = vmul.f32 %v1212, %v201
      %v1221 = vmul.f32 %v1213, %v202
      %v1222 = vmul.f32 %v1214, %v203
      %v1223 = vmul.f32 %v1215, %v204
      %v1224 = vmul.f32 %v1216, %v205
      %v1225 = vmul.f32 %v1217, %v206
      %v1226 = vmul.f32 %v1184, %v207
      %v1227 = vmul.f32 %v1185, %v208
      %v1229 = vsel %vm316, %v1137, 0
      %v1232 = vsel %vm297, %v1226, 0
      %v1235 = vsel %vm297, %v1227, 0
      %1237 = vmatprep.subr.mxu0 0.0
      %1238 = vmatpush1.msra.mxu0 0.0
      %1239 = vmatprep.subr.mxu0 0.0
      %1240 = vmatpush1.msra.mxu0 0.0
      %1241 = vmatprep.subr.mxu0 0.0
      %1242 = vmatpush1.msra.mxu0 0.0
      %1243 = vmatprep.subr.mxu0 0.0
      %1244 = vmatpush1.msra.mxu0 0.0
      %1245 = vmatprep.subr.mxu0 0.0
      %1246 = vmatpush1.msra.mxu0 0.0
      %1247 = vmatprep.subr.mxu0 0.0
      %1248 = vmatpush1.msra.mxu0 0.0
      %1249 = vmatprep.subr.mxu0 0.0
      %1250 = vmatpush1.msra.mxu0 0.0
      %1251 = vmatprep.subr.mxu0 0.0
      %1252 = vmatpush1.msra.mxu0 0.0
      %1253 = vmatprep.subr.mxu0 0.0
      %1254 = vmatpush1.msra.mxu0 0.0
      %1255 = vmatprep.subr.mxu0 0.0
      %1256 = vmatpush1.msra.mxu0 0.0
      %1257 = vmatprep.subr.mxu0 0.0
      %1258 = vmatpush1.msra.mxu0 0.0
      %1259 = vmatprep.subr.mxu0 %v1235
      %1260 = vmatpush1.msra.mxu0 %v1232
      %1261 = vmatprep.subr.mxu0 %v1225
      %1262 = vmatpush1.msra.mxu0 %v1224
      %1263 = vmatprep.subr.mxu0 %v1223
      %1264 = vmatpush1.msra.mxu0 %v1222
      %1265 = vmatprep.subr.mxu0 %v1221
      %1266 = vmatpush1.msra.mxu0 %v1220
      %1267 = vmatprep.subr.mxu0 %v1219
      %1268 = vmatpush1.msra.mxu0 %v1218
      %1269 = vmatprep.subr.mxu0 0.0
      %1270 = vmatpush2.msra.mxu0 0.0
      %1271 = vmatprep.subr.mxu0 0.0
      %1272 = vmatpush2.msra.mxu0 0.0
      %1273 = vmatprep.subr.mxu0 0.0
      %1274 = vmatpush2.msra.mxu0 0.0
      %1275 = vmatprep.subr.mxu0 0.0
      %1276 = vmatpush2.msra.mxu0 0.0
      %1277 = vmatprep.subr.mxu0 0.0
      %1278 = vmatpush2.msra.mxu0 0.0
      %1279 = vmatprep.subr.mxu0 0.0
      %1280 = vmatpush2.msra.mxu0 0.0
      %1281 = vmatprep.subr.mxu0 0.0
      %1282 = vmatpush2.msra.mxu0 0.0
      %1283 = vmatprep.subr.mxu0 0.0
      %1284 = vmatpush2.msra.mxu0 0.0
      %1285 = vmatprep.subr.mxu0 0.0
      %1286 = vmatpush2.msra.mxu0 0.0
      %1287 = vmatprep.subr.mxu0 0.0
      %1288 = vmatpush2.msra.mxu0 0.0
      %1289 = vmatprep.subr.mxu0 0.0
      %1290 = vmatpush2.msra.mxu0 0.0
      %1291 = vmatprep.subr.mxu0 0.0
      %1292 = vmatpush2.msra.mxu0 0.0
      %1293 = vmatprep.subr.mxu0 0.0
      %1294 = vmatpush2.msra.mxu0 0.0
      %1295 = vmatprep.subr.mxu0 0.0
      %1296 = vmatpush2.msra.mxu0 0.0
      %1297 = vmatprep.subr.mxu0 0.0
      %1298 = vmatpush2.msra.mxu0 0.0
      %1299 = vmatprep.subr.mxu0 0.0
      %1300 = vmatpush2.msra.mxu0 0.0
      %1301 = vmatprep.mubr.f32.mxu0 0.0
      %1302 = vmatmul.mubr.f32.gmra.mxu0 %v1229
      %v1303 = vpop.f32.mrf.mxu0
      %v1304 = vadd.f32 0.0, %v1303
      %v1305 = vpop.f32.mrf.mxu0
      %v1306 = vadd.f32 0.0, %v1305
      %1307 = vdwg.mxu0
      %v1310 = vcombine.low %v1304, %v1306
      %1312 = vst [vmem:[%s197] sm:$0xff] %v1310
      %p1313 = scmp.lt.s32.totalorder %s15, 1
      %s1314 = scalar_select %p1313, %s15, 1
      %s1315 = smul.addr %s1314, 2
      %s1316 = smul.addr %s1315, 4
      %s1317 = scalar_lea.vmem %s4, %s1316
      // Predicated region
      $region37: #{dense_block.1} parent=35 // pred_check
        %p1318 = pneg %p122
      $region38: #{dense_block.1} parent=35 // pred_check_branch
        %1320 = sbr.rel (%p1318) target = $region40
      $region39: #{dense_block.1} parent=35 // pred_region
        _
      $region40: #{dense_block.1} parent=35 // pred_fallthru
        _
    $region36: #{dense_block.1} parent=5 // pred_fallthru
      _
    %p1321 = scmp.le.s32.totalorder 2, %s10
    // Predicated region
    $region41: #{dense_block.1} parent=5 // pred_check
      %p1322 = pneg %p1321
    $region42: #{dense_block.1} parent=5 // pred_check_branch
      %1324 = sbr.rel (%p1322) target = $region44
    $region43: #{dense_block.1} parent=5 // pred_region
      %s1325 = ssub.s32 %s10, 2
      // Predicated region
      $region45: #{dense_block.1} parent=43 // pred_check
        %p1326 = pneg %p128
      $region46: #{dense_block.1} parent=43 // pred_check_branch
        %1328 = sbr.rel (%p1326) target = $region48
      $region47: #{dense_block.1} parent=43 // pred_region
        %p1329 = scmp.lt.s32.totalorder %s16, 1
        %s1330 = scalar_select %p1329, %s16, 1
        %s1331 = smul.addr %s1330, 2
        %s1332 = smul.addr %s1331, 4
        %s1333 = scalar_lea.vmem %s4, %s1332
      $region48: #{dense_block.1} parent=43 // pred_fallthru
        _
    $region44: #{dense_block.1} parent=5 // pred_fallthru
      _
  $region6: #{dense_block.1} parent=0 // loop_footer
    %s14 = sadd.s32 1, %s10
  $region7: #{dense_block.1} parent=0 // loop_footer_branch
    %9 = sbr.rel target = $region3
  $region8: #{dense_block.1} parent=0 // loop_exit
    _

</llo_original>
